<compile_context>
chip_gen: v5e
topology: v5e:2x2
jax: 0.10.0
libtpu: 0.0.40
codegen_flags: <defaults>
</compile_context>

<pallas_src>
import functools

import jax
import jax.numpy as jnp
from jax import lax
from jax.experimental import pallas as pl
from jax.experimental.pallas import tpu as pltpu

EPS = 1e-5


def _vmem_limit_bytes():
    # v7x: 64 MiB physical -> stay around 48 MiB.  v5e/v6e: 128 MiB physical
    # -> raise well above the 16/32 MiB scoped defaults.
    try:
        cap = int(pltpu.get_tpu_info().vmem_capacity_bytes)
        return int(min(cap * 3 // 4, 96 * 1024 * 1024))
    except Exception:  # conservative fallback, valid on every generation
        return 48 * 1024 * 1024


# --------- pass 1: conv (K accumulating MXU dots) + ReLU + BN partials -------
def _conv_relu_stats_kernel(x_ref, w_ref, y_ref, stats_ref, xs_ref, *,
                            K, pad, L_in, L_out, relu, need_mask):
    # x_ref:     (1, C_in, L_in)     one input sample (channels-first)
    # w_ref:     (K, C_out, C_in)    conv weight, one (C_out, C_in) slab per tap
    # y_ref:     (1, C_out, TL)      conv(+ReLU) tile, already in final layout
    # stats_ref: (1, 1, C_out, 2)    per-tile per-channel [sum, sum-of-squares]
    # xs_ref:    (Lt + 1, C_in, TL)  zero-padded sample, chunked along L
    j = pl.program_id(1)
    c_out, TL = y_ref.shape[1], y_ref.shape[2]

    # Build the zero-padded, chunked copy of this sample once (j == 0); it
    # persists in VMEM across this sample's L tiles, so x is pulled from HBM
    # once and the conv boundary zeros never exist in HBM (no wrapper pad /
    # transpose / im2col passes).  All offsets below are static.
    @pl.when(j == 0)
    def _():
        xs_ref[...] = jnp.zeros_like(xs_ref)
        for c in range(xs_ref.shape[0]):
            lo = max(c * TL - pad, 0)
            hi = min((c + 1) * TL - pad, L_in)
            if hi > lo:
                dst = lo - (c * TL - pad)
                xs_ref[c, :, dst:dst + (hi - lo)] = x_ref[0, :, lo:hi]

    # Current chunk + right-halo chunk -> (C_in, 2*TL) window; each conv tap is
    # a static lane slice of it feeding one accumulating MXU contraction.
    xwin = jnp.concatenate([xs_ref[j], xs_ref[j + 1]], axis=-1)
    acc = jnp.zeros((c_out, TL), jnp.float32)
    for k in range(K):                       # K is tiny and static -> unrolled
        acc = acc + jnp.dot(w_ref[k], xwin[:, k:k + TL],
                            preferred_element_type=jnp.float32)
    if relu:
        acc = jnp.maximum(acc, 0.0)

    if need_mask:
        # Output lanes past the true length see real data through the halo;
        # zero them so the BN partial sums stay exact (their HBM write is
        # masked by Pallas anyway).
        lane = lax.broadcasted_iota(jnp.int32, acc.shape, 1)
        acc = jnp.where(j * TL + lane < L_out, acc, 0.0)

    y_ref[0, :, :] = acc.astype(y_ref.dtype)
    s1 = jnp.sum(acc, axis=1, keepdims=True)           # (C_out, 1)
    s2 = jnp.sum(acc * acc, axis=1, keepdims=True)      # (C_out, 1)
    stats_ref[0, 0, :, :] = jnp.concatenate([s1, s2], axis=1)   # single store


# --------- pass 2: fused BatchNorm epilogue, in place, final layout ----------
def _bn_apply_kernel(y_ref, scale_ref, shift_ref, o_ref):
    y = y_ref[0, :, :].astype(jnp.float32)
    o_ref[0, :, :] = (y * scale_ref[...] + shift_ref[...]).astype(o_ref.dtype)


@functools.partial(jax.jit, static_argnames=("relu", "lane_tile"))
def conv1d_norm(x_ncl, weight, gamma, beta, *, relu=True, lane_tile=512):
    """x_ncl: (N, C_in, L); weight: (C_out, C_in, K); gamma/beta: (C_out,)."""
    N, C_in, L = x_ncl.shape
    C_out, _, K = weight.shape
    pad = K // 2
    L_out = L + 2 * pad - K + 1            # stride 1 (== L for odd K)

    # L tiling: one lane tile if the sequence is short, else 128-aligned tiles
    # of `lane_tile` lanes (partial last tile handled by in-kernel masking).
    if L_out <= lane_tile:
        TL, Lt = L_out, 1
    else:
        TL = lane_tile
        Lt = int(pl.cdiv(L_out, TL))
    assert K - 1 <= TL, "kernel width larger than the lane tile"
    need_mask = (Lt * TL) != L_out

    # Weight as one (C_out, C_in) slab per tap; tiny host-side reshape only.
    wk = jnp.transpose(weight, (2, 0, 1)).astype(x_ncl.dtype)   # (K, C_out, C_in)
    gamma_f = gamma.astype(jnp.float32)
    beta_f = beta.astype(jnp.float32)

    vmem_limit = _vmem_limit_bytes()
    cparams1 = pltpu.CompilerParams(
        # j must run sequentially per sample: it reuses the padded-sample
        # scratch filled at j == 0.  The sample axis shards across cores.
        dimension_semantics=("parallel", "arbitrary"),
        vmem_limit_bytes=vmem_limit,
    )
    cparams2 = pltpu.CompilerParams(
        dimension_semantics=("parallel", "parallel"),
        vmem_limit_bytes=vmem_limit,
    )

    xb = jnp.dtype(x_ncl.dtype).itemsize
    kernel1 = functools.partial(
        _conv_relu_stats_kernel, K=K, pad=pad, L_in=L, L_out=L_out,
        relu=relu, need_mask=need_mask)

    y_full, stats = pl.pallas_call(
        kernel1,
        out_shape=(
            jax.ShapeDtypeStruct((N, C_out, L_out), x_ncl.dtype),
            jax.ShapeDtypeStruct((N, Lt, C_out, 2), jnp.float32),
        ),
        grid_spec=pltpu.PrefetchScalarGridSpec(
            num_scalar_prefetch=0,
            grid=(N, Lt),
            in_specs=[
                pl.BlockSpec((1, C_in, L), lambda n, j: (n, 0, 0)),
                pl.BlockSpec((K, C_out, C_in), lambda n, j: (0, 0, 0)),
            ],
            out_specs=[
                pl.BlockSpec((1, C_out, TL), lambda n, j: (n, 0, j)),
                pl.BlockSpec((1, 1, C_out, 2), lambda n, j: (n, j, 0, 0)),
            ],
            scratch_shapes=[pltpu.VMEM((Lt + 1, C_in, TL), x_ncl.dtype)],
        ),
        compiler_params=cparams1,
        cost_estimate=pl.CostEstimate(
            flops=2 * N * Lt * TL * K * C_in * C_out,
            transcendentals=0,
            bytes_accessed=(N * C_in * L * xb + K * C_in * C_out * xb
                            + N * C_out * L_out * xb + N * Lt * C_out * 2 * 4)),
    )(x_ncl, wk)

    # Tiny cross-tile reduction + fold BN into one scale/shift pair.
    # (f32 sum / sum-of-squares partials; switch to per-tile (count, mean, M2)
    #  if very large N*L or activation magnitudes demand it.)
    cnt = jnp.float32(N * L_out)                 # true per-channel count
    s = jnp.sum(stats, axis=(0, 1))              # (C_out, 2)
    mean = s[:, 0] / cnt
    var = jnp.maximum(s[:, 1] / cnt - mean * mean, 0.0)
    scale = gamma_f * lax.rsqrt(var + EPS)
    shift = beta_f - mean * scale

    out = pl.pallas_call(
        _bn_apply_kernel,
        out_shape=jax.ShapeDtypeStruct((N, C_out, L_out), x_ncl.dtype),
        grid_spec=pltpu.PrefetchScalarGridSpec(
            num_scalar_prefetch=0,
            grid=(N, Lt),
            in_specs=[
                pl.BlockSpec((1, C_out, TL), lambda n, j: (n, 0, j)),
                pl.BlockSpec((C_out, 1), lambda n, j: (0, 0)),
                pl.BlockSpec((C_out, 1), lambda n, j: (0, 0)),
            ],
            out_specs=pl.BlockSpec((1, C_out, TL), lambda n, j: (n, 0, j)),
        ),
        compiler_params=cparams2,
        input_output_aliases={0: 0},             # rescale y in place
        cost_estimate=pl.CostEstimate(
            flops=2 * N * C_out * L_out,
            transcendentals=0,
            bytes_accessed=2 * N * C_out * L_out * xb + 2 * C_out * 4),
    )(y_full, scale.reshape(C_out, 1), shift.reshape(C_out, 1))

    return out                                   # (N, C_out, L_out)


def conv1d_norm_ref(x_ncl, weight, gamma, beta, *, relu=True):
    """Pure-JAX reference (mirrors the PyTorch module forward)."""
    K = weight.shape[-1]
    pad = K // 2
    y = lax.conv_general_dilated(
        x_ncl.astype(jnp.float32), weight.astype(jnp.float32),
        window_strides=(1,), padding=[(pad, pad)],
        dimension_numbers=("NCH", "OIH", "NCH"))
    if relu:
        y = jnp.maximum(y, 0.0)
    mean = jnp.mean(y, axis=(0, 2), keepdims=True)
    var = jnp.mean((y - mean) ** 2, axis=(0, 2), keepdims=True)
    y = (y - mean) * lax.rsqrt(var + EPS)
    return y * gamma[None, :, None] + beta[None, :, None]


if __name__ == "__main__":
    # Small deterministic problem: N=2, C_in=4, L=16, C_out=8, K=3.
    N, C_in, L = 2, 4, 16
    C_out, K = 8, 3

    key = jax.random.PRNGKey(0)
    kx, kw, kg, kb = jax.random.split(key, 4)

    x = jax.random.normal(kx, (N, C_in, L), dtype=jnp.float32)
    bound = 1.0 / (C_in * K) ** 0.5
    weight = jax.random.uniform(kw, (C_out, C_in, K), jnp.float32, -bound, bound)
    gamma = 1.0 + 0.1 * jax.random.normal(kg, (C_out,), jnp.float32)
    beta = 0.1 * jax.random.normal(kb, (C_out,), jnp.float32)

    out = jax.block_until_ready(conv1d_norm(x, weight, gamma, beta, relu=True))
    ref = conv1d_norm_ref(x, weight, gamma, beta, relu=True)
    assert out.shape == (N, C_out, L), out.shape
    assert jnp.max(jnp.abs(out - ref)) < 2e-4, float(jnp.max(jnp.abs(out - ref)))

    # also exercise the relu=False configuration of the module
    out2 = jax.block_until_ready(conv1d_norm(x, weight, gamma, beta, relu=False))
    ref2 = conv1d_norm_ref(x, weight, gamma, beta, relu=False)
    assert jnp.max(jnp.abs(out2 - ref2)) < 2e-4, float(jnp.max(jnp.abs(out2 - ref2)))

    print("KERNEL_OK")
</pallas_src>

<mosaic_0001>
module attributes {stable_mosaic.version = 11 : i64} {
  func.func @_conv_relu_stats_kernel(%arg0: i32, %arg1: i32, %arg2: memref<1x4x16xf32, #tpu.memory_space<vmem>>, %arg3: memref<3x8x4xf32, #tpu.memory_space<vmem>>, %arg4: memref<1x8x16xf32, #tpu.memory_space<vmem>>, %arg5: memref<1x1x8x2xf32, #tpu.memory_space<vmem>>, %arg6: memref<2x4x16xf32, #tpu.memory_space<vmem>>) attributes {dimension_semantics = [#tpu.dimension_semantics<parallel>, #tpu.dimension_semantics<arbitrary>], iteration_bounds = array<i64: 2, 1>, scalar_prefetch = 0 : i64, scratch_operands = 1 : i64, tpu.core_type = #tpu.core_type<tc>, window_params = [{transform_indices = @transform_0, window_bounds = array<i64: 1, 4, 16>}, {pipeline_mode = #tpu.pipeline_mode<synchronous>, transform_indices = @transform_1, window_bounds = array<i64: 3, 8, 4>}, {transform_indices = @transform_2, window_bounds = array<i64: 1, 8, 16>}, {transform_indices = @transform_3, window_bounds = array<i64: 1, 1, 8, 2>}]} {
    %c0_i32 = arith.constant 0 : i32
    %0 = arith.cmpi eq, %arg1, %c0_i32 : i32
    %1 = arith.extui %0 : i1 to i32
    %c0_i32_0 = arith.constant 0 : i32
    %2 = arith.cmpi ne, %1, %c0_i32_0 : i32
    scf.if %2 {
      %cst_24 = arith.constant 0.000000e+00 : f32
      %41 = vector.broadcast %cst_24 : f32 to vector<2x4x16xf32>
      %c0_25 = arith.constant 0 : index
      %c0_26 = arith.constant 0 : index
      %c0_27 = arith.constant 0 : index
      %42 = vector.load %arg6[%c0_25, %c0_26, %c0_27] : memref<2x4x16xf32, #tpu.memory_space<vmem>>, vector<2x4x16xf32>
      tpu.vector_store %arg6[%c0_25, %c0_26, %c0_27], %41 {strides = array<i32>} : memref<2x4x16xf32, #tpu.memory_space<vmem>>, vector<2x4x16xf32>,
      %c0_28 = arith.constant 0 : index
      %c0_29 = arith.constant 0 : index
      %c0_30 = arith.constant 0 : index
      %43 = vector.load %arg2[%c0_28, %c0_29, %c0_30] : memref<1x4x16xf32, #tpu.memory_space<vmem>>, vector<1x4x15xf32>
      %44 = vector.shape_cast %43 : vector<1x4x15xf32> to vector<4x15xf32>
      %c0_31 = arith.constant 0 : index
      %c0_32 = arith.constant 0 : index
      %c1_33 = arith.constant 1 : index
      %45 = vector.load %arg6[%c0_31, %c0_32, %c1_33] : memref<2x4x16xf32, #tpu.memory_space<vmem>>, vector<1x4x15xf32>
      %46 = vector.shape_cast %45 : vector<1x4x15xf32> to vector<4x15xf32>
      %47 = vector.shape_cast %44 : vector<4x15xf32> to vector<1x4x15xf32>
      tpu.vector_store %arg6[%c0_31, %c0_32, %c1_33], %47 {strides = array<i32>} : memref<2x4x16xf32, #tpu.memory_space<vmem>>, vector<1x4x15xf32>,
      %c0_34 = arith.constant 0 : index
      %c0_35 = arith.constant 0 : index
      %c15 = arith.constant 15 : index
      %48 = vector.load %arg2[%c0_34, %c0_35, %c15] : memref<1x4x16xf32, #tpu.memory_space<vmem>>, vector<1x4x1xf32>
      %49 = vector.shape_cast %48 : vector<1x4x1xf32> to vector<4x1xf32>
      %c1_36 = arith.constant 1 : index
      %c0_37 = arith.constant 0 : index
      %c0_38 = arith.constant 0 : index
      %50 = vector.load %arg6[%c1_36, %c0_37, %c0_38] : memref<2x4x16xf32, #tpu.memory_space<vmem>>, vector<1x4x1xf32>
      %51 = vector.shape_cast %50 : vector<1x4x1xf32> to vector<4x1xf32>
      %52 = vector.shape_cast %49 : vector<4x1xf32> to vector<1x4x1xf32>
      tpu.vector_store %arg6[%c1_36, %c0_37, %c0_38], %52 {strides = array<i32>} : memref<2x4x16xf32, #tpu.memory_space<vmem>>, vector<1x4x1xf32>,
    } else {
    }
    %3 = arith.index_cast %arg1 : i32 to index
    %c0 = arith.constant 0 : index
    %c0_1 = arith.constant 0 : index
    %4 = vector.load %arg6[%3, %c0, %c0_1] : memref<2x4x16xf32, #tpu.memory_space<vmem>>, vector<1x4x16xf32>
    %5 = vector.shape_cast %4 : vector<1x4x16xf32> to vector<4x16xf32>
    %c1_i32 = arith.constant 1 : i32
    %6 = arith.addi %arg1, %c1_i32 : i32
    %7 = arith.index_cast %6 : i32 to index
    %c0_2 = arith.constant 0 : index
    %c0_3 = arith.constant 0 : index
    %8 = vector.load %arg6[%7, %c0_2, %c0_3] : memref<2x4x16xf32, #tpu.memory_space<vmem>>, vector<1x4x16xf32>
    %9 = vector.shape_cast %8 : vector<1x4x16xf32> to vector<4x16xf32>
    %10 = tpu.concatenate %5, %9 in 1 : vector<4x16xf32>, vector<4x16xf32> -> vector<4x32xf32>
    %cst = arith.constant 0.000000e+00 : f32
    %11 = vector.broadcast %cst : f32 to vector<8x16xf32>
    %c0_4 = arith.constant 0 : index
    %c0_5 = arith.constant 0 : index
    %c0_6 = arith.constant 0 : index
    %12 = vector.load %arg3[%c0_4, %c0_5, %c0_6] : memref<3x8x4xf32, #tpu.memory_space<vmem>>, vector<1x8x4xf32>
    %13 = vector.shape_cast %12 : vector<1x8x4xf32> to vector<8x4xf32>
    %14 = vector.extract_strided_slice %10 {offsets = [0, 0], sizes = [4, 16], strides = [1, 1]} : vector<4x32xf32> to vector<4x16xf32>
    %cst_7 = arith.constant dense<0.000000e+00> : vector<8x16xf32>
    %15 = tpu.matmul %13, %14, %cst_7 {dimension_numbers = #tpu.dot_dimension_numbers<[1], [0], [0], [1], [0, 0, 1, 1], [], []>} : vector<8x4xf32>, vector<4x16xf32>, vector<8x16xf32> -> vector<8x16xf32>
    %16 = arith.addf %11, %15 : vector<8x16xf32>
    %c1 = arith.constant 1 : index
    %c0_8 = arith.constant 0 : index
    %c0_9 = arith.constant 0 : index
    %17 = vector.load %arg3[%c1, %c0_8, %c0_9] : memref<3x8x4xf32, #tpu.memory_space<vmem>>, vector<1x8x4xf32>
    %18 = vector.shape_cast %17 : vector<1x8x4xf32> to vector<8x4xf32>
    %19 = vector.extract_strided_slice %10 {offsets = [0, 1], sizes = [4, 16], strides = [1, 1]} : vector<4x32xf32> to vector<4x16xf32>
    %cst_10 = arith.constant dense<0.000000e+00> : vector<8x16xf32>
    %20 = tpu.matmul %18, %19, %cst_10 {dimension_numbers = #tpu.dot_dimension_numbers<[1], [0], [0], [1], [0, 0, 1, 1], [], []>} : vector<8x4xf32>, vector<4x16xf32>, vector<8x16xf32> -> vector<8x16xf32>
    %21 = arith.addf %16, %20 : vector<8x16xf32>
    %c2 = arith.constant 2 : index
    %c0_11 = arith.constant 0 : index
    %c0_12 = arith.constant 0 : index
    %22 = vector.load %arg3[%c2, %c0_11, %c0_12] : memref<3x8x4xf32, #tpu.memory_space<vmem>>, vector<1x8x4xf32>
    %23 = vector.shape_cast %22 : vector<1x8x4xf32> to vector<8x4xf32>
    %24 = vector.extract_strided_slice %10 {offsets = [0, 2], sizes = [4, 16], strides = [1, 1]} : vector<4x32xf32> to vector<4x16xf32>
    %cst_13 = arith.constant dense<0.000000e+00> : vector<8x16xf32>
    %25 = tpu.matmul %23, %24, %cst_13 {dimension_numbers = #tpu.dot_dimension_numbers<[1], [0], [0], [1], [0, 0, 1, 1], [], []>} : vector<8x4xf32>, vector<4x16xf32>, vector<8x16xf32> -> vector<8x16xf32>
    %26 = arith.addf %21, %25 : vector<8x16xf32>
    %cst_14 = arith.constant 0.000000e+00 : f32
    %27 = vector.broadcast %cst_14 : f32 to vector<8x16xf32>
    %28 = arith.maximumf %26, %27 : vector<8x16xf32>
    %c0_15 = arith.constant 0 : index
    %c0_16 = arith.constant 0 : index
    %c0_17 = arith.constant 0 : index
    %29 = vector.load %arg4[%c0_15, %c0_16, %c0_17] : memref<1x8x16xf32, #tpu.memory_space<vmem>>, vector<1x8x16xf32>
    %30 = vector.shape_cast %29 : vector<1x8x16xf32> to vector<8x16xf32>
    %31 = vector.shape_cast %28 : vector<8x16xf32> to vector<1x8x16xf32>
    tpu.vector_store %arg4[%c0_15, %c0_16, %c0_17], %31 {strides = array<i32>} : memref<1x8x16xf32, #tpu.memory_space<vmem>>, vector<1x8x16xf32>,
    %cst_18 = arith.constant dense<0.000000e+00> : vector<8xf32>
    %32 = vector.multi_reduction <add>, %28, %cst_18 [1] : vector<8x16xf32> to vector<8xf32>
    %33 = vector.shape_cast %32 : vector<8xf32> to vector<8x1xf32>
    %34 = arith.mulf %28, %28 : vector<8x16xf32>
    %cst_19 = arith.constant dense<0.000000e+00> : vector<8xf32>
    %35 = vector.multi_reduction <add>, %34, %cst_19 [1] : vector<8x16xf32> to vector<8xf32>
    %36 = vector.shape_cast %35 : vector<8xf32> to vector<8x1xf32>
    %37 = tpu.concatenate %33, %36 in 1 : vector<8x1xf32>, vector<8x1xf32> -> vector<8x2xf32>
    %c0_20 = arith.constant 0 : index
    %c0_21 = arith.constant 0 : index
    %c0_22 = arith.constant 0 : index
    %c0_23 = arith.constant 0 : index
    %38 = vector.load %arg5[%c0_20, %c0_21, %c0_22, %c0_23] : memref<1x1x8x2xf32, #tpu.memory_space<vmem>>, vector<1x1x8x2xf32>
    %39 = vector.shape_cast %38 : vector<1x1x8x2xf32> to vector<8x2xf32>
    %40 = vector.shape_cast %37 : vector<8x2xf32> to vector<1x1x8x2xf32>
    tpu.vector_store %arg5[%c0_20, %c0_21, %c0_22, %c0_23], %40 {strides = array<i32>} : memref<1x1x8x2xf32, #tpu.memory_space<vmem>>, vector<1x1x8x2xf32>,
    return
  }
  func.func @transform_0(%arg0: i32, %arg1: i32) -> (i32, i32, i32) {
    %c0_i32 = arith.constant 0 : i32
    %c0_i32_0 = arith.constant 0 : i32
    %c0_i32_1 = arith.constant 0 : i32
    return %arg0, %c0_i32, %c0_i32_0 : i32, i32, i32
  }
  func.func @transform_1(%arg0: i32, %arg1: i32) -> (i32, i32, i32) {
    %c0_i32 = arith.constant 0 : i32
    %c0_i32_0 = arith.constant 0 : i32
    %c0_i32_1 = arith.constant 0 : i32
    %c0_i32_2 = arith.constant 0 : i32
    return %c0_i32, %c0_i32_0, %c0_i32_1 : i32, i32, i32
  }
  func.func @transform_2(%arg0: i32, %arg1: i32) -> (i32, i32, i32) {
    %c0_i32 = arith.constant 0 : i32
    %c0_i32_0 = arith.constant 0 : i32
    return %arg0, %c0_i32, %arg1 : i32, i32, i32
  }
  func.func @transform_3(%arg0: i32, %arg1: i32) -> (i32, i32, i32, i32) {
    %c0_i32 = arith.constant 0 : i32
    %c0_i32_0 = arith.constant 0 : i32
    %c0_i32_1 = arith.constant 0 : i32
    return %arg0, %arg1, %c0_i32, %c0_i32_0 : i32, i32, i32, i32
  }
}

module attributes {stable_mosaic.version = 11 : i64} {
  func.func @_bn_apply_kernel(%arg0: i32, %arg1: i32, %arg2: memref<1x8x16xf32, #tpu.memory_space<vmem>>, %arg3: memref<8x1xf32, #tpu.memory_space<vmem>>, %arg4: memref<8x1xf32, #tpu.memory_space<vmem>>, %arg5: memref<1x8x16xf32, #tpu.memory_space<vmem>>) attributes {dimension_semantics = [#tpu.dimension_semantics<parallel>, #tpu.dimension_semantics<parallel>], iteration_bounds = array<i64: 2, 1>, scalar_prefetch = 0 : i64, scratch_operands = 0 : i64, tpu.core_type = #tpu.core_type<tc>, window_params = [{transform_indices = @transform_0, window_bounds = array<i64: 1, 8, 16>}, {pipeline_mode = #tpu.pipeline_mode<synchronous>, transform_indices = @transform_1, window_bounds = array<i64: 8, 1>}, {pipeline_mode = #tpu.pipeline_mode<synchronous>, transform_indices = @transform_2, window_bounds = array<i64: 8, 1>}, {transform_indices = @transform_3, window_bounds = array<i64: 1, 8, 16>}]} {
    %c0 = arith.constant 0 : index
    %c0_0 = arith.constant 0 : index
    %c0_1 = arith.constant 0 : index
    %0 = vector.load %arg2[%c0, %c0_0, %c0_1] : memref<1x8x16xf32, #tpu.memory_space<vmem>>, vector<1x8x16xf32>
    %1 = vector.shape_cast %0 : vector<1x8x16xf32> to vector<8x16xf32>
    %c0_2 = arith.constant 0 : index
    %c0_3 = arith.constant 0 : index
    %2 = vector.load %arg3[%c0_2, %c0_3] : memref<8x1xf32, #tpu.memory_space<vmem>>, vector<8x1xf32>
    %3 = vector.broadcast %2 : vector<8x1xf32> to vector<8x16xf32>
    %4 = arith.mulf %1, %3 : vector<8x16xf32>
    %c0_4 = arith.constant 0 : index
    %c0_5 = arith.constant 0 : index
    %5 = vector.load %arg4[%c0_4, %c0_5] : memref<8x1xf32, #tpu.memory_space<vmem>>, vector<8x1xf32>
    %6 = vector.broadcast %5 : vector<8x1xf32> to vector<8x16xf32>
    %7 = arith.addf %4, %6 : vector<8x16xf32>
    %c0_6 = arith.constant 0 : index
    %c0_7 = arith.constant 0 : index
    %c0_8 = arith.constant 0 : index
    %8 = vector.load %arg5[%c0_6, %c0_7, %c0_8] : memref<1x8x16xf32, #tpu.memory_space<vmem>>, vector<1x8x16xf32>
    %9 = vector.shape_cast %8 : vector<1x8x16xf32> to vector<8x16xf32>
    %10 = vector.shape_cast %7 : vector<8x16xf32> to vector<1x8x16xf32>
    tpu.vector_store %arg5[%c0_6, %c0_7, %c0_8], %10 {strides = array<i32>} : memref<1x8x16xf32, #tpu.memory_space<vmem>>, vector<1x8x16xf32>,
    return
  }
  func.func @transform_0(%arg0: i32, %arg1: i32) -> (i32, i32, i32) {
    %c0_i32 = arith.constant 0 : i32
    %c0_i32_0 = arith.constant 0 : i32
    return %arg0, %c0_i32, %arg1 : i32, i32, i32
  }
  func.func @transform_1(%arg0: i32, %arg1: i32) -> (i32, i32) {
    %c0_i32 = arith.constant 0 : i32
    %c0_i32_0 = arith.constant 0 : i32
    %c0_i32_1 = arith.constant 0 : i32
    return %c0_i32, %c0_i32_0 : i32, i32
  }
  func.func @transform_2(%arg0: i32, %arg1: i32) -> (i32, i32) {
    %c0_i32 = arith.constant 0 : i32
    %c0_i32_0 = arith.constant 0 : i32
    %c0_i32_1 = arith.constant 0 : i32
    return %c0_i32, %c0_i32_0 : i32, i32
  }
  func.func @transform_3(%arg0: i32, %arg1: i32) -> (i32, i32, i32) {
    %c0_i32 = arith.constant 0 : i32
    %c0_i32_0 = arith.constant 0 : i32
    return %arg0, %c0_i32, %arg1 : i32, i32, i32
  }
}

</mosaic_0001>

<llo_original>
// kernel: conv1d_norm.3
$region0: #{conv1d_norm.3}
  #allocation0 [shape = 'u32[]', space=smem, size = 0x4, offset = 0x4, fixed_abs, tag = 'smem constant byte address 0x4 - core index']
  #allocation1 [shape = 'u32[72,128]{1,0:T(1,128)}', space=vmem, size = 0x9000, scoped, tag = 'internal scratch']
  %s0 = inlined_call_operand.hbm [shape: f32[2,8,16], index: 0, kind: input, shape index: {}, may-alias: {0,3}]
  %s1 = inlined_call_operand.vmem [shape: f32[8,1], index: 1, kind: input, shape index: {}]
  %s2 = inlined_call_operand.vmem [shape: f32[8,1], index: 2, kind: input, shape index: {}]
  %s3 = inlined_call_operand.hbm [shape: f32[2,8,16], index: 3, kind: output, shape index: {}, may-alias: {0,3}]
  %s4 = sld [smem:[#allocation0]]
  $region49: #{conv1d_norm.3} parent=0
    _
  %s6 = ssub.s32 1, %s4
  %s7 = scalar_select 0, %s6, %s4
  $region1: #{conv1d_norm.3} parent=0
    #allocation2 [shape = 'u8[8192]{0}', space=vmem, size = 0x2000, scoped, tag = 'input window, operand 0']
    #allocation3 [shape = 's32[2]{0}', space=sflag, size = 0x8, scoped, tag = 'scoped memory for conv1d_norm.3']
    #allocation4 [shape = 's32[2]{0}', space=sflag, size = 0x8, scoped, tag = 'scoped memory for conv1d_norm.3']
    #allocation5 [shape = 'u8[8192]{0}', space=vmem, size = 0x2000, scoped, tag = 'output window, operand 0']
    %8 = vsyncpa [#allocation3], 0
    %s9 = scalar_lea.sflag [#allocation3], 1
    %10 = vsyncpa %s9, 0
    %11 = vsyncpa [#allocation4], 0
    %s12 = scalar_lea.sflag [#allocation4], 1
    %13 = vsyncpa %s12, 0
    loop: start=0, step=1, limit=4
    $region2: #{conv1d_norm.3} parent=1 // loop_pre_header
      _
    $region3: #{conv1d_norm.3} parent=1 // loop_header
      %s15 = sphi 0, %s19
      %p16 = scmp.ge.s32.totalorder %s15, 4
      %s22 = sphi 0, %s34
      %s23 = sphi 0, %s30
      %s24 = sphi 0, %s22
      %s25 = sphi 0, %s23
      %s26 = sphi 0, %s24
      %s27 = sphi 0, %s25
      %s39 = sphi 0, %s41
      %s42 = sphi 0, %s39
      %s43 = sphi 0, %s42
      %s59 = sphi 0, %s43
      %s63 = sphi 0, %s63
      %s65 = sphi 0, %s63
      %s66 = sphi 0, %s65
      %s80 = sphi 0, %s66
      %s84 = sphi 0, %s84
      %s86 = sphi 0, %s84
      %s87 = sphi 0, %s86
      %s101 = sphi 0, %s87
      %s109 = sphi 0, %s111
      %s112 = sphi 0, %s109
      %s113 = sphi 0, %s112
      %s129 = sphi 0, %s113
    $region4: #{conv1d_norm.3} parent=1 // loop_header_branch
      %18 = sbr.rel (%p16) target = $region8
    $region5: #{conv1d_norm.3} parent=1 // loop_body
      %s20 = ssub.s32 %s15, 1
      %s21 = ssub.s32 %s15, 2
      %s28 = sadd.s32 1, %s23
      %p29 = scmp.ge.s32.totalorder %s28, 1
      %s30 = scalar_select %p29, 0, %s28
      %s31 = sadd.s32 1, %s22
      %s32 = scalar_select %p29, %s31, %s22
      %p33 = scmp.ge.s32.totalorder %s32, 2
      %s34 = scalar_select %p33, 0, %s32
      %s35 = ssub.s32 %s22, %s34
      %s36 = ssub.s32 %s23, %s30
      %s37 = sor.u32 %s35, %s36
      %p38 = scmp.eq.s32.totalorder %s37, 0
      %s40 = sadd.s32 %s39, 1
      %s41 = scalar_select %p38, %s39, %s40
      %p44 = pneg %p38
      %p45 = scmp.eq.s32.totalorder %s15, 1
      %p46 = por %p44, %p45
      %p47 = scmp.ne.s32.totalorder %s39, %s42
      %p48 = scmp.eq.s32.totalorder %s15, 0
      %p49 = por %p47, %p48
      %p50 = scmp.ne.s32.totalorder %s39, %s42
      %p51 = scmp.eq.s32.totalorder %s20, 1
      %p52 = por %p50, %p51
      %p53 = scmp.ne.s32.totalorder %s42, %s43
      %p54 = scmp.eq.s32.totalorder %s20, 0
      %p55 = por %p53, %p54
      %p56 = scmp.ne.s32.totalorder %s42, %s43
      %p57 = scmp.eq.s32.totalorder %s21, 1
      %p58 = por %p56, %p57
      %p60 = scmp.ne.s32.totalorder %s43, %s59
      %p61 = scmp.eq.s32.totalorder %s21, 0
      %p62 = por %p60, %p61
      %s64 = sadd.s32 %s63, 1
      %p67 = scmp.eq.s32.totalorder %s15, 1
      %p68 = scmp.ne.s32.totalorder %s63, %s65
      %p69 = scmp.eq.s32.totalorder %s15, 0
      %p70 = por %p68, %p69
      %p71 = scmp.ne.s32.totalorder %s63, %s65
      %p72 = scmp.eq.s32.totalorder %s20, 1
      %p73 = por %p71, %p72
      %p74 = scmp.ne.s32.totalorder %s65, %s66
      %p75 = scmp.eq.s32.totalorder %s20, 0
      %p76 = por %p74, %p75
      %p77 = scmp.ne.s32.totalorder %s65, %s66
      %p78 = scmp.eq.s32.totalorder %s21, 1
      %p79 = por %p77, %p78
      %p81 = scmp.ne.s32.totalorder %s66, %s80
      %p82 = scmp.eq.s32.totalorder %s21, 0
      %p83 = por %p81, %p82
      %s85 = sadd.s32 %s84, 1
      %p88 = scmp.eq.s32.totalorder %s15, 1
      %p89 = scmp.ne.s32.totalorder %s84, %s86
      %p90 = scmp.eq.s32.totalorder %s15, 0
      %p91 = por %p89, %p90
      %p92 = scmp.ne.s32.totalorder %s84, %s86
      %p93 = scmp.eq.s32.totalorder %s20, 1
      %p94 = por %p92, %p93
      %p95 = scmp.ne.s32.totalorder %s86, %s87
      %p96 = scmp.eq.s32.totalorder %s20, 0
      %p97 = por %p95, %p96
      %p98 = scmp.ne.s32.totalorder %s86, %s87
      %p99 = scmp.eq.s32.totalorder %s21, 1
      %p100 = por %p98, %p99
      %p102 = scmp.ne.s32.totalorder %s87, %s101
      %p103 = scmp.eq.s32.totalorder %s21, 0
      %p104 = por %p102, %p103
      %s105 = ssub.s32 %s22, %s34
      %s106 = ssub.s32 %s23, %s30
      %s107 = sor.u32 %s105, %s106
      %p108 = scmp.eq.s32.totalorder %s107, 0
      %s110 = sadd.s32 %s109, 1
      %s111 = scalar_select %p108, %s109, %s110
      %p114 = pneg %p108
      %p115 = scmp.eq.s32.totalorder %s15, 1
      %p116 = por %p114, %p115
      %p117 = scmp.ne.s32.totalorder %s109, %s112
      %p118 = scmp.eq.s32.totalorder %s15, 0
      %p119 = por %p117, %p118
      %p120 = scmp.ne.s32.totalorder %s109, %s112
      %p121 = scmp.eq.s32.totalorder %s20, 1
      %p122 = por %p120, %p121
      %p123 = scmp.ne.s32.totalorder %s112, %s113
      %p124 = scmp.eq.s32.totalorder %s20, 0
      %p125 = por %p123, %p124
      %p126 = scmp.ne.s32.totalorder %s112, %s113
      %p127 = scmp.eq.s32.totalorder %s21, 1
      %p128 = por %p126, %p127
      %p130 = scmp.ne.s32.totalorder %s113, %s129
      %p131 = scmp.eq.s32.totalorder %s21, 0
      %p132 = por %p130, %p131
      %p133 = scmp.le.s32.totalorder 1, %s15
      %p134 = scmp.lt.s32.totalorder %s15, 3
      %p135 = pnand %p133, %p134
      %p136 = pneg %p135
      // Predicated region
      $region9: #{conv1d_norm.3} parent=5 // pred_check
        _
      $region10: #{conv1d_norm.3} parent=5 // pred_check_branch
        %138 = sbr.rel (%p135) target = $region12
      $region11: #{conv1d_norm.3} parent=5 // pred_region
        %s139 = ssub.s32 %s15, 1
        // Predicated region
        $region13: #{conv1d_norm.3} parent=11 // pred_check
          %p140 = pneg %p76
        $region14: #{conv1d_norm.3} parent=11 // pred_check_branch
          %142 = sbr.rel (%p140) target = $region16
        $region15: #{conv1d_norm.3} parent=11 // pred_region
          _
        $region16: #{conv1d_norm.3} parent=11 // pred_fallthru
          _
        // Predicated region
        $region17: #{conv1d_norm.3} parent=11 // pred_check
          %p143 = pneg %p97
        $region18: #{conv1d_norm.3} parent=11 // pred_check_branch
          %145 = sbr.rel (%p143) target = $region20
        $region19: #{conv1d_norm.3} parent=11 // pred_region
          _
        $region20: #{conv1d_norm.3} parent=11 // pred_fallthru
          _
      $region12: #{conv1d_norm.3} parent=5 // pred_fallthru
        _
      %p146 = scmp.lt.s32.totalorder %s15, 2
      // Predicated region
      $region21: #{conv1d_norm.3} parent=5 // pred_check
        %p147 = pneg %p146
      $region22: #{conv1d_norm.3} parent=5 // pred_check_branch
        %149 = sbr.rel (%p147) target = $region24
      $region23: #{conv1d_norm.3} parent=5 // pred_region
        // Predicated region
        $region25: #{conv1d_norm.3} parent=23 // pred_check
          %p150 = pneg %p49
        $region26: #{conv1d_norm.3} parent=23 // pred_check_branch
          %152 = sbr.rel (%p150) target = $region28
        $region27: #{conv1d_norm.3} parent=23 // pred_region
          %s153 = sand.u32 %s39, 1
          %s154 = scalar_lea.sflag [#allocation3], %s153
          %s155 = sand.u32 %s39, 1
          %s156 = smul.addr %s155, 8
          %s157 = scalar_lea.vmem [#allocation2], %s156
          %159 = vsyncadd %s154, 0
          %s160 = sadd.s32 %s23, %s22
          %s161 = smul.addr %s160, 8
          %s162 = scalar_lea.hbm %s0, %s161
          %s164 = sshll.u32 %s162, 4
          %s165 = int_to_ptr.hbm [resolvable:$true] %s164
          %s166 = sshll.u32 %s157, 4
          %s167 = int_to_ptr.vmem [resolvable:$true] %s166
          %169 = dma.hbm_to_vmem [thread:$0]  %s165, 128, %s167, %s154
        $region28: #{conv1d_norm.3} parent=23 // pred_fallthru
          _
      $region24: #{conv1d_norm.3} parent=5 // pred_fallthru
        _
      %p170 = scmp.le.s32.totalorder 1, %s15
      %p171 = scmp.lt.s32.totalorder %s15, 3
      %p172 = pnand %p170, %p171
      %p173 = pneg %p172
      // Predicated region
      $region29: #{conv1d_norm.3} parent=5 // pred_check
        _
      $region30: #{conv1d_norm.3} parent=5 // pred_check_branch
        %175 = sbr.rel (%p172) target = $region32
      $region31: #{conv1d_norm.3} parent=5 // pred_region
        %s176 = ssub.s32 %s15, 1
        %s177 = sand.u32 %s42, 1
        %s178 = scalar_lea.sflag [#allocation3], %s177
        %s179 = sand.u32 %s42, 1
        %s180 = smul.addr %s179, 8
        %s181 = scalar_lea.vmem [#allocation2], %s180
        // Predicated region
        $region33: #{conv1d_norm.3} parent=31 // pred_check
          %p182 = pneg %p55
        $region34: #{conv1d_norm.3} parent=31 // pred_check_branch
          %184 = sbr.rel (%p182) target = $region36
        $region35: #{conv1d_norm.3} parent=31 // pred_region
          %186 = dma.done %s178, 128
        $region36: #{conv1d_norm.3} parent=31 // pred_fallthru
          _
        %s187 = sand.u32 %s42, 1
        %s188 = scalar_lea.sflag [#allocation3], %s187
        %s189 = sand.u32 %s42, 1
        %s190 = smul.addr %s189, 8
        %s191 = scalar_lea.vmem [#allocation2], %s190
        %p192 = pneg %p55
        %p193 = pneg %p52
        %p194 = pneg %p76
        %p195 = pneg %p73
        %p196 = pneg %p97
        %p197 = pneg %p94
        %p198 = pneg %p125
        %p199 = pneg %p122
        %s200 = sand.u32 %s112, 1
        %s201 = scalar_lea.sflag [#allocation4], %s200
        %s202 = sand.u32 %s112, 1
        %s203 = smul.addr %s202, 8
        %s204 = scalar_lea.vmem [#allocation5], %s203
        %v205 = vld [vmem:[%s181] sm:$0xff]
        %v206 = vld [vmem:[%s1] sm:$0xff]
        %208 = vset.pattern.permute.xlu0 0
        %209 = vperm.xlu0 %208, %v206
        %v210 = vpop.permute.xlu0 %209
        %v212 = vmul.f32 %v205, %v210
        %v213 = vld [vmem:[%s2] sm:$0xff]
        %215 = vset.pattern.permute.xlu0 0
        %216 = vperm.xlu0 %215, %v213
        %v217 = vpop.permute.xlu0 %216
        %v219 = vadd.f32 %v212, %v217
        %vm220 = vcmask 130048
        %221 = vst.msk [vmem:[%s204] sm:$0xff] %vm220, %v219
        %s222 = sand.u32 %s112, 1
        %s223 = scalar_lea.sflag [#allocation4], %s222
        %s224 = sand.u32 %s112, 1
        %s225 = smul.addr %s224, 8
        %s226 = scalar_lea.vmem [#allocation5], %s225
        // Predicated region
        $region37: #{conv1d_norm.3} parent=31 // pred_check
          %p227 = pneg %p122
        $region38: #{conv1d_norm.3} parent=31 // pred_check_branch
          %229 = sbr.rel (%p227) target = $region40
        $region39: #{conv1d_norm.3} parent=31 // pred_region
          %231 = vsyncadd %s223, 0
          %s232 = sadd.s32 %s25, %s24
          %s233 = smul.addr %s232, 8
          %s234 = scalar_lea.hbm %s3, %s233
          %s236 = sshll.u32 %s226, 4
          %s237 = int_to_ptr.vmem [resolvable:$true] %s236
          %s238 = sshll.u32 %s234, 4
          %s239 = int_to_ptr.hbm [resolvable:$true] %s238
          %241 = dma.vmem_to_hbm [thread:$0]  %s237, 128, %s239, %s223
        $region40: #{conv1d_norm.3} parent=31 // pred_fallthru
          _
      $region32: #{conv1d_norm.3} parent=5 // pred_fallthru
        _
      %p242 = scmp.le.s32.totalorder 2, %s15
      // Predicated region
      $region41: #{conv1d_norm.3} parent=5 // pred_check
        %p243 = pneg %p242
      $region42: #{conv1d_norm.3} parent=5 // pred_check_branch
        %245 = sbr.rel (%p243) target = $region44
      $region43: #{conv1d_norm.3} parent=5 // pred_region
        %s246 = ssub.s32 %s15, 2
        // Predicated region
        $region45: #{conv1d_norm.3} parent=43 // pred_check
          %p247 = pneg %p128
        $region46: #{conv1d_norm.3} parent=43 // pred_check_branch
          %249 = sbr.rel (%p247) target = $region48
        $region47: #{conv1d_norm.3} parent=43 // pred_region
          %s250 = sand.u32 %s113, 1
          %s251 = scalar_lea.sflag [#allocation4], %s250
          %s252 = sand.u32 %s113, 1
          %s253 = smul.addr %s252, 8
          %s254 = scalar_lea.vmem [#allocation5], %s253
          %256 = dma.done %s251, 128
        $region48: #{conv1d_norm.3} parent=43 // pred_fallthru
          _
      $region44: #{conv1d_norm.3} parent=5 // pred_fallthru
        _
    $region6: #{conv1d_norm.3} parent=1 // loop_footer
      %s19 = sadd.s32 1, %s15
    $region7: #{conv1d_norm.3} parent=1 // loop_footer_branch
      %14 = sbr.rel target = $region3
    $region8: #{conv1d_norm.3} parent=1 // loop_exit
      _
    %257 = vsyncpa [#allocation3], 1
    %s258 = scalar_lea.sflag [#allocation3], 1
    %259 = vsyncpa %s258, 1
    %260 = vsyncpa [#allocation4], 1
    %s261 = scalar_lea.sflag [#allocation4], 1
    %262 = vsyncpa %s261, 1

// kernel: conv1d_norm.2
$region0: #{conv1d_norm.2}
  #allocation0 [shape = 'u32[]', space=smem, size = 0x4, offset = 0x4, fixed_abs, tag = 'smem constant byte address 0x4 - core index']
  #allocation1 [shape = 'u32[72,128]{1,0:T(1,128)}', space=vmem, size = 0x9000, scoped, tag = 'internal scratch']
  #allocation2 [shape = 'f32[2,4,16]{2,1,0:T(4,128)}', space=vmem, size = 0x1000, scoped, tag = 'scratch operand']
  %s0 = inlined_call_operand.vmem [shape: f32[2,4,16], index: 0, kind: input, shape index: {}]
  %s1 = inlined_call_operand.vmem [shape: f32[3,8,4], index: 1, kind: input, shape index: {}]
  %s2 = inlined_call_operand.hbm [shape: f32[2,8,16], index: 2, kind: output, shape index: {0}]
  %s3 = inlined_call_operand.vmem [shape: f32[2,1,8,2], index: 3, kind: output, shape index: {1}]
  %4 = xla_tuple %s2, %s3
  %s5 = sld [smem:[#allocation0]]
  $region53: #{conv1d_norm.2} parent=0
    _
  %s7 = ssub.s32 1, %s5
  %s8 = scalar_select 0, %s7, %s5
  $region1: #{conv1d_norm.2} parent=0
    #allocation3 [shape = 'u8[8192]{0}', space=vmem, size = 0x2000, scoped, tag = 'output window, operand 0']
    #allocation4 [shape = 's32[2]{0}', space=sflag, size = 0x8, scoped, tag = 'scoped memory for conv1d_norm.2']
    %9 = vsyncpa [#allocation4], 0
    %s10 = scalar_lea.sflag [#allocation4], 1
    %11 = vsyncpa %s10, 0
    loop: start=0, step=1, limit=4
    $region2: #{conv1d_norm.2} parent=1 // loop_pre_header
      _
    $region3: #{conv1d_norm.2} parent=1 // loop_header
      %s13 = sphi 0, %s17
      %p14 = scmp.ge.s32.totalorder %s13, 4
      %s20 = sphi 0, %s32
      %s21 = sphi 0, %s28
      %s22 = sphi 0, %s20
      %s23 = sphi 0, %s21
      %s24 = sphi 0, %s22
      %s25 = sphi 0, %s23
      %s35 = sphi 0, %s37
      %s38 = sphi 0, %s35
      %s39 = sphi 0, %s38
      %s55 = sphi 0, %s39
      %s59 = sphi 0, %s59
      %s61 = sphi 0, %s59
      %s62 = sphi 0, %s61
      %s76 = sphi 0, %s62
      %s84 = sphi 0, %s86
      %s87 = sphi 0, %s84
      %s88 = sphi 0, %s87
      %s104 = sphi 0, %s88
      %s112 = sphi 0, %s114
      %s115 = sphi 0, %s112
      %s116 = sphi 0, %s115
      %s132 = sphi 0, %s116
    $region4: #{conv1d_norm.2} parent=1 // loop_header_branch
      %16 = sbr.rel (%p14) target = $region8
    $region5: #{conv1d_norm.2} parent=1 // loop_body
      %s18 = ssub.s32 %s13, 1
      %s19 = ssub.s32 %s13, 2
      %s26 = sadd.s32 1, %s21
      %p27 = scmp.ge.s32.totalorder %s26, 1
      %s28 = scalar_select %p27, 0, %s26
      %s29 = sadd.s32 1, %s20
      %s30 = scalar_select %p27, %s29, %s20
      %p31 = scmp.ge.s32.totalorder %s30, 2
      %s32 = scalar_select %p31, 0, %s30
      %s33 = ssub.s32 %s20, %s32
      %p34 = scmp.eq.s32.totalorder %s33, 0
      %s36 = sadd.s32 %s35, 1
      %s37 = scalar_select %p34, %s35, %s36
      %p40 = pneg %p34
      %p41 = scmp.eq.s32.totalorder %s13, 1
      %p42 = por %p40, %p41
      %p43 = scmp.ne.s32.totalorder %s35, %s38
      %p44 = scmp.eq.s32.totalorder %s13, 0
      %p45 = por %p43, %p44
      %p46 = scmp.ne.s32.totalorder %s35, %s38
      %p47 = scmp.eq.s32.totalorder %s18, 1
      %p48 = por %p46, %p47
      %p49 = scmp.ne.s32.totalorder %s38, %s39
      %p50 = scmp.eq.s32.totalorder %s18, 0
      %p51 = por %p49, %p50
      %p52 = scmp.ne.s32.totalorder %s38, %s39
      %p53 = scmp.eq.s32.totalorder %s19, 1
      %p54 = por %p52, %p53
      %p56 = scmp.ne.s32.totalorder %s39, %s55
      %p57 = scmp.eq.s32.totalorder %s19, 0
      %p58 = por %p56, %p57
      %s60 = sadd.s32 %s59, 1
      %p63 = scmp.eq.s32.totalorder %s13, 1
      %p64 = scmp.ne.s32.totalorder %s59, %s61
      %p65 = scmp.eq.s32.totalorder %s13, 0
      %p66 = por %p64, %p65
      %p67 = scmp.ne.s32.totalorder %s59, %s61
      %p68 = scmp.eq.s32.totalorder %s18, 1
      %p69 = por %p67, %p68
      %p70 = scmp.ne.s32.totalorder %s61, %s62
      %p71 = scmp.eq.s32.totalorder %s18, 0
      %p72 = por %p70, %p71
      %p73 = scmp.ne.s32.totalorder %s61, %s62
      %p74 = scmp.eq.s32.totalorder %s19, 1
      %p75 = por %p73, %p74
      %p77 = scmp.ne.s32.totalorder %s62, %s76
      %p78 = scmp.eq.s32.totalorder %s19, 0
      %p79 = por %p77, %p78
      %s80 = ssub.s32 %s20, %s32
      %s81 = ssub.s32 %s21, %s28
      %s82 = sor.u32 %s80, %s81
      %p83 = scmp.eq.s32.totalorder %s82, 0
      %s85 = sadd.s32 %s84, 1
      %s86 = scalar_select %p83, %s84, %s85
      %p89 = pneg %p83
      %p90 = scmp.eq.s32.totalorder %s13, 1
      %p91 = por %p89, %p90
      %p92 = scmp.ne.s32.totalorder %s84, %s87
      %p93 = scmp.eq.s32.totalorder %s13, 0
      %p94 = por %p92, %p93
      %p95 = scmp.ne.s32.totalorder %s84, %s87
      %p96 = scmp.eq.s32.totalorder %s18, 1
      %p97 = por %p95, %p96
      %p98 = scmp.ne.s32.totalorder %s87, %s88
      %p99 = scmp.eq.s32.totalorder %s18, 0
      %p100 = por %p98, %p99
      %p101 = scmp.ne.s32.totalorder %s87, %s88
      %p102 = scmp.eq.s32.totalorder %s19, 1
      %p103 = por %p101, %p102
      %p105 = scmp.ne.s32.totalorder %s88, %s104
      %p106 = scmp.eq.s32.totalorder %s19, 0
      %p107 = por %p105, %p106
      %s108 = ssub.s32 %s20, %s32
      %s109 = ssub.s32 %s21, %s28
      %s110 = sor.u32 %s108, %s109
      %p111 = scmp.eq.s32.totalorder %s110, 0
      %s113 = sadd.s32 %s112, 1
      %s114 = scalar_select %p111, %s112, %s113
      %p117 = pneg %p111
      %p118 = scmp.eq.s32.totalorder %s13, 1
      %p119 = por %p117, %p118
      %p120 = scmp.ne.s32.totalorder %s112, %s115
      %p121 = scmp.eq.s32.totalorder %s13, 0
      %p122 = por %p120, %p121
      %p123 = scmp.ne.s32.totalorder %s112, %s115
      %p124 = scmp.eq.s32.totalorder %s18, 1
      %p125 = por %p123, %p124
      %p126 = scmp.ne.s32.totalorder %s115, %s116
      %p127 = scmp.eq.s32.totalorder %s18, 0
      %p128 = por %p126, %p127
      %p129 = scmp.ne.s32.totalorder %s115, %s116
      %p130 = scmp.eq.s32.totalorder %s19, 1
      %p131 = por %p129, %p130
      %p133 = scmp.ne.s32.totalorder %s116, %s132
      %p134 = scmp.eq.s32.totalorder %s19, 0
      %p135 = por %p133, %p134
      %p136 = scmp.le.s32.totalorder 1, %s13
      %p137 = scmp.lt.s32.totalorder %s13, 3
      %p138 = pnand %p136, %p137
      %p139 = pneg %p138
      // Predicated region
      $region9: #{conv1d_norm.2} parent=5 // pred_check
        _
      $region10: #{conv1d_norm.2} parent=5 // pred_check_branch
        %141 = sbr.rel (%p138) target = $region12
      $region11: #{conv1d_norm.2} parent=5 // pred_region
        %s142 = ssub.s32 %s13, 1
        // Predicated region
        $region13: #{conv1d_norm.2} parent=11 // pred_check
          %p143 = pneg %p72
        $region14: #{conv1d_norm.2} parent=11 // pred_check_branch
          %145 = sbr.rel (%p143) target = $region16
        $region15: #{conv1d_norm.2} parent=11 // pred_region
          _
        $region16: #{conv1d_norm.2} parent=11 // pred_fallthru
          _
      $region12: #{conv1d_norm.2} parent=5 // pred_fallthru
        _
      %p146 = scmp.lt.s32.totalorder %s13, 2
      // Predicated region
      $region17: #{conv1d_norm.2} parent=5 // pred_check
        %p147 = pneg %p146
      $region18: #{conv1d_norm.2} parent=5 // pred_check_branch
        %149 = sbr.rel (%p147) target = $region20
      $region19: #{conv1d_norm.2} parent=5 // pred_region
        // Predicated region
        $region21: #{conv1d_norm.2} parent=19 // pred_check
          %p150 = pneg %p45
        $region22: #{conv1d_norm.2} parent=19 // pred_check_branch
          %152 = sbr.rel (%p150) target = $region24
        $region23: #{conv1d_norm.2} parent=19 // pred_region
          %p153 = scmp.lt.s32.totalorder %s20, 1
          %s154 = scalar_select %p153, %s20, 1
          %s155 = smul.addr %s154, 4
          %s156 = scalar_lea.vmem %s0, %s155
        $region24: #{conv1d_norm.2} parent=19 // pred_fallthru
          _
      $region20: #{conv1d_norm.2} parent=5 // pred_fallthru
        _
      %p157 = scmp.le.s32.totalorder 1, %s13
      %p158 = scmp.lt.s32.totalorder %s13, 3
      %p159 = pnand %p157, %p158
      %p160 = pneg %p159
      // Predicated region
      $region25: #{conv1d_norm.2} parent=5 // pred_check
        _
      $region26: #{conv1d_norm.2} parent=5 // pred_check_branch
        %162 = sbr.rel (%p159) target = $region28
      $region27: #{conv1d_norm.2} parent=5 // pred_region
        %s163 = ssub.s32 %s13, 1
        %p164 = scmp.lt.s32.totalorder %s22, 1
        %s165 = scalar_select %p164, %s22, 1
        %s166 = smul.addr %s165, 4
        %s167 = scalar_lea.vmem %s0, %s166
        %p168 = pneg %p51
        %p169 = pneg %p48
        %p170 = pneg %p72
        %p171 = pneg %p69
        %p172 = pneg %p100
        %p173 = pneg %p97
        %s174 = sand.u32 %s87, 1
        %s175 = scalar_lea.sflag [#allocation4], %s174
        %s176 = sand.u32 %s87, 1
        %s177 = smul.addr %s176, 8
        %s178 = scalar_lea.vmem [#allocation3], %s177
        %p179 = pneg %p128
        %p180 = pneg %p125
        %p181 = scmp.lt.s32.totalorder %s22, 1
        %s182 = scalar_select %p181, %s22, 1
        %p183 = scmp.lt.s32.totalorder %s23, 0
        %s184 = scalar_select %p183, %s23, 0
        %s185 = sadd.s32 %s184, %s182
        %s186 = smul.addr %s185, 8
        %s187 = scalar_lea.vmem %s3, %s186
        %p188 = scmp.lt.s32.totalorder %s22, 1
        %s189 = scalar_select %p188, %s22, 1
        %s190 = smul.addr %s189, 4
        %s191 = scalar_lea.vmem %s0, %s190
        %p192 = scmp.lt.s32.totalorder %s22, 1
        %s193 = scalar_select %p192, %s22, 1
        %p194 = scmp.lt.s32.totalorder %s23, 0
        %s195 = scalar_select %p194, %s23, 0
        %s196 = sadd.s32 %s195, %s193
        %s197 = smul.addr %s196, 8
        %s198 = scalar_lea.vmem %s3, %s197
        %p199 = scmp.eq.s32.totalorder %s23, 0
        // Predicated region
        $region29: #{conv1d_norm.2} parent=27 // pred_check
          %p200 = pneg %p199
        $region30: #{conv1d_norm.2} parent=27 // pred_check_branch
          %202 = sbr.rel (%p200) target = $region32
        $region31: #{conv1d_norm.2} parent=27 // pred_region
          %vm203 = vcmask 125952
          %204 = vst.msk [vmem:[#allocation2] sm:$0xf] %vm203, 0.0
          %205 = vst.msk [vmem:[#allocation2 + $0x4] sm:$0xf] %vm203, 0.0
          %v206 = vld [vmem:[%s191] sm:$0xf]
          %208 = vrot.lane.b32.xlu0 %v206, 1
          %v209 = vpop.permute.xlu0 %208
          %vm211 = vcmask 125960
          %212 = vst.msk [vmem:[#allocation2] sm:$0xf] %vm211, %v209
          %v213 = vld [vmem:[%s191] sm:$0xf]
          %215 = vrot.lane.b32.xlu0 %v213, 113
          %v216 = vpop.permute.xlu0 %215
          %s218 = scalar_lea.vmem [#allocation2], 4
          %vm219 = vcmask 3072
          %220 = vst.msk [vmem:[%s218] sm:$0xf] %vm219, %v216
        $region32: #{conv1d_norm.2} parent=27 // pred_fallthru
          _
        %s221 = smul.u32 %s23, 4
        %s222 = scalar_lea.vmem [#allocation2], %s221
        %v223 = vld [vmem:[%s222] sm:$0xf]
        %s224 = sadd.s32 %s23, 1
        %s225 = smul.u32 %s224, 4
        %s226 = scalar_lea.vmem [#allocation2], %s225
        %v227 = vld [vmem:[%s226] sm:$0xf]
        %229 = vrot.lane.b32.xlu0 %v227, 16
        %v230 = vpop.permute.xlu0 %229
        %vm232 = vcmask 130048
        %v233 = vsel %vm232, %v223, %v230
        %v234 = vld [vmem:[%s1] sm:$0xff]
        %s235 = scalar_lea.vmem %s1, 8
        %v236 = vld [vmem:[%s235] sm:$0xff]
        %238 = vrot.lane.b32.xlu0 %v233, 127
        %v239 = vpop.permute.xlu0 %238
        %vm240 = vcmask 31744
        %v242 = vsel %vm240, %v236, 0
        %vm244 = vcmask 1043456
        %v245 = vsel %vm244, %v239, 0
        %247 = vmatpush.msra.mxu0 0.0
        %248 = vmatpush.msra.mxu0 0.0
        %249 = vmatpush.msra.mxu0 0.0
        %250 = vmatpush.msra.mxu0 0.0
        %251 = vmatpush.msra.mxu0 0.0
        %252 = vmatpush.msra.mxu0 0.0
        %253 = vmatpush.msra.mxu0 0.0
        %254 = vmatpush.msra.mxu0 0.0
        %255 = vmatpush.msra.mxu0 0.0
        %256 = vmatpush.msra.mxu0 0.0
        %257 = vmatpush.msra.mxu0 0.0
        %258 = vmatpush.msra.mxu0 0.0
        %259 = vmatpush.msra.mxu0 0.0
        %260 = vmatpush.msra.mxu0 0.0
        %261 = vmatpush.msra.mxu0 0.0
        %262 = vmatpush.msra.mxu0 %v245
        %263 = vmatmul.f32.gmra.mxu0 %v242
        %v264 = vpop.f32.mrf.mxu0
        %v265 = vadd.f32 0.0, %v264
        %266 = vdwg.mxu0
        %v268 = vsel %vm240, %v234, 0
        %v270 = vsel %vm244, %v233, 0
        %272 = vmatpush.msra.mxu0 0.0
        %273 = vmatpush.msra.mxu0 0.0
        %274 = vmatpush.msra.mxu0 0.0
        %275 = vmatpush.msra.mxu0 0.0
        %276 = vmatpush.msra.mxu0 0.0
        %277 = vmatpush.msra.mxu0 0.0
        %278 = vmatpush.msra.mxu0 0.0
        %279 = vmatpush.msra.mxu0 0.0
        %280 = vmatpush.msra.mxu0 0.0
        %281 = vmatpush.msra.mxu0 0.0
        %282 = vmatpush.msra.mxu0 0.0
        %283 = vmatpush.msra.mxu0 0.0
        %284 = vmatpush.msra.mxu0 0.0
        %285 = vmatpush.msra.mxu0 0.0
        %286 = vmatpush.msra.mxu0 0.0
        %287 = vmatpush.msra.mxu0 %v270
        %288 = vmatmul.f32.gmra.mxu0 %v268
        %v289 = vpop.f32.mrf.mxu0
        %v290 = vadd.f32 %v265, %v289
        %291 = vdwg.mxu0
        %s292 = scalar_lea.vmem %s1, 16
        %v293 = vld [vmem:[%s292] sm:$0xff]
        %294 = vrot.lane.b32.xlu0 %v233, 126
        %v295 = vpop.permute.xlu0 %294
        %v297 = vsel %vm240, %v293, 0
        %v299 = vsel %vm244, %v295, 0
        %301 = vmatpush.msra.mxu0 0.0
        %302 = vmatpush.msra.mxu0 0.0
        %303 = vmatpush.msra.mxu0 0.0
        %304 = vmatpush.msra.mxu0 0.0
        %305 = vmatpush.msra.mxu0 0.0
        %306 = vmatpush.msra.mxu0 0.0
        %307 = vmatpush.msra.mxu0 0.0
        %308 = vmatpush.msra.mxu0 0.0
        %309 = vmatpush.msra.mxu0 0.0
        %310 = vmatpush.msra.mxu0 0.0
        %311 = vmatpush.msra.mxu0 0.0
        %312 = vmatpush.msra.mxu0 0.0
        %313 = vmatpush.msra.mxu0 0.0
        %314 = vmatpush.msra.mxu0 0.0
        %315 = vmatpush.msra.mxu0 0.0
        %316 = vmatpush.msra.mxu0 %v299
        %317 = vmatmul.f32.gmra.mxu0 %v297
        %v318 = vpop.f32.mrf.mxu0
        %v319 = vadd.f32 0.0, %v318
        %320 = vdwg.mxu0
        %v321 = vadd.f32 %v290, %v319
        %v322 = vmax.f32 %v321, 0.0
        %323 = vst.msk [vmem:[%s178] sm:$0xff] %vm232, %v322
        %v324 = vsel %vm232, %v322, 0.0
        %325 = vadd.xlane.f32.xlu0 %v324
        %v326 = vpop.xlane.xlu0 %325
        %v327 = vmul.f32 %v322, %v322
        %v328 = vsel %vm232, %v327, 0.0
        %329 = vadd.xlane.f32.xlu0 %v328
        %v330 = vpop.xlane.xlu0 %329
        %vm331 = vcmask 7168
        %v332 = vsel %vm331, %v326, %v330
        %vm333 = vcmask 15360
        %334 = vst.msk [vmem:[%s198] sm:$0xff] %vm333, %v332
        %s335 = sand.u32 %s87, 1
        %s336 = scalar_lea.sflag [#allocation4], %s335
        %s337 = sand.u32 %s87, 1
        %s338 = smul.addr %s337, 8
        %s339 = scalar_lea.vmem [#allocation3], %s338
        %p340 = scmp.lt.s32.totalorder %s22, 1
        %s341 = scalar_select %p340, %s22, 1
        %p342 = scmp.lt.s32.totalorder %s23, 0
        %s343 = scalar_select %p342, %s23, 0
        %s344 = sadd.s32 %s343, %s341
        %s345 = smul.addr %s344, 8
        %s346 = scalar_lea.vmem %s3, %s345
        // Predicated region
        $region33: #{conv1d_norm.2} parent=27 // pred_check
          %p347 = pneg %p97
        $region34: #{conv1d_norm.2} parent=27 // pred_check_branch
          %349 = sbr.rel (%p347) target = $region36
        $region35: #{conv1d_norm.2} parent=27 // pred_region
          %351 = vsyncadd %s336, 0
          %s352 = sadd.s32 %s23, %s22
          %s353 = smul.addr %s352, 8
          %s354 = scalar_lea.hbm %s2, %s353
          %s356 = sshll.u32 %s339, 4
          %s357 = int_to_ptr.vmem [resolvable:$true] %s356
          %s358 = sshll.u32 %s354, 4
          %s359 = int_to_ptr.hbm [resolvable:$true] %s358
          %361 = dma.vmem_to_hbm [thread:$0]  %s357, 128, %s359, %s336
        $region36: #{conv1d_norm.2} parent=27 // pred_fallthru
          _
        // Predicated region
        $region37: #{conv1d_norm.2} parent=27 // pred_check
          %p362 = pneg %p125
        $region38: #{conv1d_norm.2} parent=27 // pred_check_branch
          %364 = sbr.rel (%p362) target = $region40
        $region39: #{conv1d_norm.2} parent=27 // pred_region
          _
        $region40: #{conv1d_norm.2} parent=27 // pred_fallthru
          _
      $region28: #{conv1d_norm.2} parent=5 // pred_fallthru
        _
      %p365 = scmp.le.s32.totalorder 2, %s13
      // Predicated region
      $region41: #{conv1d_norm.2} parent=5 // pred_check
        %p366 = pneg %p365
      $region42: #{conv1d_norm.2} parent=5 // pred_check_branch
        %368 = sbr.rel (%p366) target = $region44
      $region43: #{conv1d_norm.2} parent=5 // pred_region
        %s369 = ssub.s32 %s13, 2
        // Predicated region
        $region45: #{conv1d_norm.2} parent=43 // pred_check
          %p370 = pneg %p103
        $region46: #{conv1d_norm.2} parent=43 // pred_check_branch
          %372 = sbr.rel (%p370) target = $region48
        $region47: #{conv1d_norm.2} parent=43 // pred_region
          %s373 = sand.u32 %s88, 1
          %s374 = scalar_lea.sflag [#allocation4], %s373
          %s375 = sand.u32 %s88, 1
          %s376 = smul.addr %s375, 8
          %s377 = scalar_lea.vmem [#allocation3], %s376
          %379 = dma.done %s374, 128
        $region48: #{conv1d_norm.2} parent=43 // pred_fallthru
          _
        // Predicated region
        $region49: #{conv1d_norm.2} parent=43 // pred_check
          %p380 = pneg %p131
        $region50: #{conv1d_norm.2} parent=43 // pred_check_branch
          %382 = sbr.rel (%p380) target = $region52
        $region51: #{conv1d_norm.2} parent=43 // pred_region
          %p383 = scmp.lt.s32.totalorder %s24, 1
          %s384 = scalar_select %p383, %s24, 1
          %p385 = scmp.lt.s32.totalorder %s25, 0
          %s386 = scalar_select %p385, %s25, 0
          %s387 = sadd.s32 %s386, %s384
          %s388 = smul.addr %s387, 8
          %s389 = scalar_lea.vmem %s3, %s388
        $region52: #{conv1d_norm.2} parent=43 // pred_fallthru
          _
      $region44: #{conv1d_norm.2} parent=5 // pred_fallthru
        _
    $region6: #{conv1d_norm.2} parent=1 // loop_footer
      %s17 = sadd.s32 1, %s13
    $region7: #{conv1d_norm.2} parent=1 // loop_footer_branch
      %12 = sbr.rel target = $region3
    $region8: #{conv1d_norm.2} parent=1 // loop_exit
      _
    %390 = vsyncpa [#allocation4], 1
    %s391 = scalar_lea.sflag [#allocation4], 1
    %392 = vsyncpa %s391, 1

</llo_original>
